<compile_context>
chip_gen: v5e
topology: v5e:2x2
jax: 0.10.0
libtpu: 0.0.40
codegen_flags: <defaults>
</compile_context>

<pallas_src>
import jax
import jax.numpy as jnp
from jax import lax
from jax.experimental import pallas as pl
from jax.experimental.pallas import tpu as pltpu


def _pg_kernel(x_ref, w1_ref, b1_ref, w2_ref, b2_ref, o_ref):
    x = x_ref[...]                                # (tile_b, num_obs) f32
    w1 = w1_ref[...]                              # (64, num_obs)     f32 (PyTorch [out, in])

    # h^T = W1 . x^T -> (64, tile_b): contract both operands over the feature axis
    # (A.B^T form; lowers natively on the MXU, only 64 "moving" rows instead of tile_b).
    h = lax.dot_general(w1, x, (((1,), (1,)), ((), ())),
                        preferred_element_type=jnp.float32)          # (64, tile_b)
    h = h + b1_ref[...]                           # (64, 1) broadcasts across lanes
    h = jnp.maximum(h, 0.01 * h)                  # LeakyReLU (negative_slope = 0.01)

    # logits^T = W2 . h^T -> (num_act, tile_b): plain (M,K)x(K,N) matmul.
    logits = lax.dot_general(w2_ref[...], h, (((1,), (0,)), ((), ())),
                             preferred_element_type=jnp.float32)     # (num_act, tile_b)
    logits = logits + b2_ref[...]                 # (num_act, 1)

    # Numerically stable softmax over the class axis (sublanes). Batch fills the lanes,
    # so exp / reductions / reciprocal / store run on dense vregs and stores are unmasked.
    m = jnp.max(logits, axis=0, keepdims=True)    # (1, tile_b)
    e = jnp.exp(logits - m)
    denom = jnp.sum(e, axis=0, keepdims=True)
    o_ref[...] = (e * pl.reciprocal(denom, approx=False)).astype(o_ref.dtype)


def _cdiv(a, b):
    return -(-a // b)


def _round_up(n, m):
    return _cdiv(n, m) * m


# 8192 rows ~= 1 MiB of f32 x per grid step (x2 buffers) plus ~4-6 MiB of f32
# intermediates -> comfortably under v5e's 16 MiB scoped-VMEM default. Raise together
# with CompilerParams(vmem_limit_bytes=...) if even larger steps are wanted on v6e/v7x.
_MAX_TILE_B = 8192


def pg_network_forward(x, w1, b1, w2, b2):
    """Forward pass of PGnetwork.

    x : (B, num_obs) float32
    w1: (64, num_obs), b1: (64,)        -- PyTorch nn.Linear layout ([out_features, in_features])
    w2: (num_act, 64), b2: (num_act,)
    Returns (B, num_act) float32 softmax probabilities (softmax over dim=1).
    """
    B, num_obs = x.shape
    hidden = w1.shape[0]
    num_act = w2.shape[0]

    # Batch tiling: one block for small batches; otherwise row tiles that are a multiple
    # of 512 (keeps the lane-dim of the output block 128-divisible), capped at
    # _MAX_TILE_B, and sized for >= ~8 grid steps (v7x megacore balance). tile_b does
    # not have to divide B: the last block is partial (masked output stores).
    if B <= 1024:
        tile_b = B
    else:
        tile_b = min(_MAX_TILE_B, _round_up(_cdiv(B, 8), 512))
    grid = (_cdiv(B, tile_b),)

    x = x.astype(jnp.float32)
    w1 = w1.astype(jnp.float32)
    w2 = w2.astype(jnp.float32)
    b1_col = b1.astype(jnp.float32).reshape(hidden, 1)
    b2_col = b2.astype(jnp.float32).reshape(num_act, 1)

    cost = pl.CostEstimate(
        flops=2 * B * (num_obs * hidden + hidden * num_act),
        transcendentals=B * (num_act + 1),
        bytes_accessed=4 * (B * num_obs + B * num_act
                            + hidden * num_obs + hidden + num_act * hidden + num_act),
    )

    out_t = pl.pallas_call(
        _pg_kernel,
        out_shape=jax.ShapeDtypeStruct((num_act, B), jnp.float32),
        grid=grid,
        in_specs=[
            pl.BlockSpec((tile_b, num_obs), lambda i: (i, 0)),   # x: streamed per tile
            pl.BlockSpec((hidden, num_obs), lambda i: (0, 0)),   # w1: VMEM-resident
            pl.BlockSpec((hidden, 1), lambda i: (0, 0)),         # b1
            pl.BlockSpec((num_act, hidden), lambda i: (0, 0)),   # w2
            pl.BlockSpec((num_act, 1), lambda i: (0, 0)),        # b2
        ],
        out_specs=pl.BlockSpec((num_act, tile_b), lambda i: (0, i)),  # lane-dense slab
        compiler_params=pltpu.CompilerParams(
            dimension_semantics=("parallel",),     # independent batch tiles (v7x megacore)
        ),
        cost_estimate=cost,
    )(x, w1, b1_col, w2, b2_col)

    # Layout plumbing only: transpose the small (num_act, B) lane-dense slab back.
    # TODO(synk): if this extra HBM pass over the (tiny) output ever shows up, move the
    # transpose in-kernel (probs^T -> (tile_b, num_act)) and store row-major directly.
    return out_t.T


def init_params(key, num_obs, num_act, hidden=64):
    """Deterministic PyTorch-style init: U(-1/sqrt(fan_in), 1/sqrt(fan_in)), PyTorch layout."""
    k1, k2, k3, k4 = jax.random.split(key, 4)
    bound1 = 1.0 / float(jnp.sqrt(jnp.float32(num_obs)))
    bound2 = 1.0 / float(jnp.sqrt(jnp.float32(hidden)))
    w1 = jax.random.uniform(k1, (hidden, num_obs), jnp.float32, -bound1, bound1)
    b1 = jax.random.uniform(k2, (hidden,), jnp.float32, -bound1, bound1)
    w2 = jax.random.uniform(k3, (num_act, hidden), jnp.float32, -bound2, bound2)
    b2 = jax.random.uniform(k4, (num_act,), jnp.float32, -bound2, bound2)
    return w1, b1, w2, b2


def _reference(x, w1, b1, w2, b2):
    h = jnp.dot(x, w1.T, precision=lax.Precision.HIGHEST) + b1
    h = jnp.where(h >= 0, h, 0.01 * h)
    logits = jnp.dot(h, w2.T, precision=lax.Precision.HIGHEST) + b2
    return jax.nn.softmax(logits, axis=1)


if __name__ == "__main__":
    key = jax.random.PRNGKey(0)
    kx, kp, kx2 = jax.random.split(key, 3)

    # Small shapes consistent with the module.
    batch, num_obs, num_act = 8, 32, 8
    x = jax.random.normal(kx, (batch, num_obs), jnp.float32)
    w1, b1, w2, b2 = init_params(kp, num_obs, num_act)

    out = jax.block_until_ready(pg_network_forward(x, w1, b1, w2, b2))
    ref = _reference(x, w1, b1, w2, b2)

    assert out.shape == (batch, num_act)
    assert jnp.allclose(jnp.sum(out, axis=1), 1.0, atol=1e-5)
    assert jnp.allclose(out, ref, atol=2e-3, rtol=2e-3), "mismatch vs f32 reference"

    # Also exercise the multi-tile path with a partial last block (B % tile_b != 0).
    x2 = jax.random.normal(kx2, (1030, num_obs), jnp.float32)
    out2 = jax.block_until_ready(pg_network_forward(x2, w1, b1, w2, b2))
    ref2 = _reference(x2, w1, b1, w2, b2)
    assert out2.shape == (1030, num_act)
    assert jnp.allclose(jnp.sum(out2, axis=1), 1.0, atol=1e-5)
    assert jnp.allclose(out2, ref2, atol=2e-3, rtol=2e-3), "mismatch on multi-tile path"

    print("KERNEL_OK")
</pallas_src>

<mosaic_0001>
module attributes {stable_mosaic.version = 11 : i64} {
  func.func @_pg_kernel(%arg0: i32, %arg1: memref<8x32xf32, #tpu.memory_space<vmem>>, %arg2: memref<64x32xf32, #tpu.memory_space<vmem>>, %arg3: memref<64x1xf32, #tpu.memory_space<vmem>>, %arg4: memref<8x64xf32, #tpu.memory_space<vmem>>, %arg5: memref<8x1xf32, #tpu.memory_space<vmem>>, %arg6: memref<8x8xf32, #tpu.memory_space<vmem>>) attributes {dimension_semantics = [#tpu.dimension_semantics<parallel>], iteration_bounds = array<i64: 1>, scalar_prefetch = 0 : i64, scratch_operands = 0 : i64, tpu.core_type = #tpu.core_type<tc>, window_params = [{transform_indices = @transform_0, window_bounds = array<i64: 8, 32>}, {pipeline_mode = #tpu.pipeline_mode<synchronous>, transform_indices = @transform_1, window_bounds = array<i64: 64, 32>}, {pipeline_mode = #tpu.pipeline_mode<synchronous>, transform_indices = @transform_2, window_bounds = array<i64: 64, 1>}, {pipeline_mode = #tpu.pipeline_mode<synchronous>, transform_indices = @transform_3, window_bounds = array<i64: 8, 64>}, {pipeline_mode = #tpu.pipeline_mode<synchronous>, transform_indices = @transform_4, window_bounds = array<i64: 8, 1>}, {transform_indices = @transform_5, window_bounds = array<i64: 8, 8>}]} {
    %c0 = arith.constant 0 : index
    %c0_0 = arith.constant 0 : index
    %0 = vector.load %arg1[%c0, %c0_0] : memref<8x32xf32, #tpu.memory_space<vmem>>, vector<8x32xf32>
    %c0_1 = arith.constant 0 : index
    %c0_2 = arith.constant 0 : index
    %1 = vector.load %arg2[%c0_1, %c0_2] : memref<64x32xf32, #tpu.memory_space<vmem>>, vector<64x32xf32>
    %cst = arith.constant dense<0.000000e+00> : vector<64x8xf32>
    %2 = tpu.matmul %1, %0, %cst {dimension_numbers = #tpu.dot_dimension_numbers<[1], [1], [0], [0], [0, 0, 1, 0], [], []>} : vector<64x32xf32>, vector<8x32xf32>, vector<64x8xf32> -> vector<64x8xf32>
    %c0_3 = arith.constant 0 : index
    %c0_4 = arith.constant 0 : index
    %3 = vector.load %arg3[%c0_3, %c0_4] : memref<64x1xf32, #tpu.memory_space<vmem>>, vector<64x1xf32>
    %4 = vector.broadcast %3 : vector<64x1xf32> to vector<64x8xf32>
    %5 = arith.addf %2, %4 : vector<64x8xf32>
    %cst_5 = arith.constant 0.00999999977 : f32
    %6 = vector.broadcast %cst_5 : f32 to vector<64x8xf32>
    %7 = arith.mulf %6, %5 : vector<64x8xf32>
    %8 = arith.maximumf %5, %7 : vector<64x8xf32>
    %c0_6 = arith.constant 0 : index
    %c0_7 = arith.constant 0 : index
    %9 = vector.load %arg4[%c0_6, %c0_7] : memref<8x64xf32, #tpu.memory_space<vmem>>, vector<8x64xf32>
    %cst_8 = arith.constant dense<0.000000e+00> : vector<8x8xf32>
    %10 = tpu.matmul %9, %8, %cst_8 {dimension_numbers = #tpu.dot_dimension_numbers<[1], [0], [0], [1], [0, 0, 1, 1], [], []>} : vector<8x64xf32>, vector<64x8xf32>, vector<8x8xf32> -> vector<8x8xf32>
    %c0_9 = arith.constant 0 : index
    %c0_10 = arith.constant 0 : index
    %11 = vector.load %arg5[%c0_9, %c0_10] : memref<8x1xf32, #tpu.memory_space<vmem>>, vector<8x1xf32>
    %12 = vector.broadcast %11 : vector<8x1xf32> to vector<8x8xf32>
    %13 = arith.addf %10, %12 : vector<8x8xf32>
    %cst_11 = arith.constant dense<0xFF800000> : vector<8xf32>
    %14 = vector.multi_reduction <maximumf>, %13, %cst_11 [0] : vector<8x8xf32> to vector<8xf32>
    %15 = vector.shape_cast %14 : vector<8xf32> to vector<1x8xf32>
    %16 = vector.broadcast %15 : vector<1x8xf32> to vector<8x8xf32>
    %17 = arith.subf %13, %16 : vector<8x8xf32>
    %18 = math.exp %17 : vector<8x8xf32>
    %cst_12 = arith.constant dense<0.000000e+00> : vector<8xf32>
    %19 = vector.multi_reduction <add>, %18, %cst_12 [0] : vector<8x8xf32> to vector<8xf32>
    %20 = vector.shape_cast %19 : vector<8xf32> to vector<1x8xf32>
    %21 = tpu.reciprocal %20 : vector<1x8xf32> -> vector<1x8xf32>
    %22 = vector.broadcast %21 : vector<1x8xf32> to vector<8x8xf32>
    %23 = arith.mulf %18, %22 : vector<8x8xf32>
    %c0_13 = arith.constant 0 : index
    %c0_14 = arith.constant 0 : index
    %24 = vector.load %arg6[%c0_13, %c0_14] : memref<8x8xf32, #tpu.memory_space<vmem>>, vector<8x8xf32>
    tpu.vector_store %arg6[%c0_13, %c0_14], %23 {strides = array<i32>} : memref<8x8xf32, #tpu.memory_space<vmem>>, vector<8x8xf32>,
    return
  }
  func.func @transform_0(%arg0: i32) -> (i32, i32) {
    %c0_i32 = arith.constant 0 : i32
    %c0_i32_0 = arith.constant 0 : i32
    return %arg0, %c0_i32 : i32, i32
  }
  func.func @transform_1(%arg0: i32) -> (i32, i32) {
    %c0_i32 = arith.constant 0 : i32
    %c0_i32_0 = arith.constant 0 : i32
    %c0_i32_1 = arith.constant 0 : i32
    return %c0_i32, %c0_i32_0 : i32, i32
  }
  func.func @transform_2(%arg0: i32) -> (i32, i32) {
    %c0_i32 = arith.constant 0 : i32
    %c0_i32_0 = arith.constant 0 : i32
    %c0_i32_1 = arith.constant 0 : i32
    return %c0_i32, %c0_i32_0 : i32, i32
  }
  func.func @transform_3(%arg0: i32) -> (i32, i32) {
    %c0_i32 = arith.constant 0 : i32
    %c0_i32_0 = arith.constant 0 : i32
    %c0_i32_1 = arith.constant 0 : i32
    return %c0_i32, %c0_i32_0 : i32, i32
  }
  func.func @transform_4(%arg0: i32) -> (i32, i32) {
    %c0_i32 = arith.constant 0 : i32
    %c0_i32_0 = arith.constant 0 : i32
    %c0_i32_1 = arith.constant 0 : i32
    return %c0_i32, %c0_i32_0 : i32, i32
  }
  func.func @transform_5(%arg0: i32) -> (i32, i32) {
    %c0_i32 = arith.constant 0 : i32
    %c0_i32_0 = arith.constant 0 : i32
    return %c0_i32, %arg0 : i32, i32
  }
}

</mosaic_0001>

<llo_original>
// kernel: tpu_custom_call.1
$region0: #{tpu_custom_call.1}
  #allocation0 [shape = 'u32[]', space=smem, size = 0x4, offset = 0x4, fixed_abs, tag = 'smem constant byte address 0x4 - core index']
  #allocation1 [shape = 'u32[72,128]{1,0:T(1,128)}', space=vmem, size = 0x9000, scoped, tag = 'internal scratch']
  %s0 = inlined_call_operand.vmem [shape: f32[8,32], index: 0, kind: input, shape index: {}]
  %s1 = inlined_call_operand.vmem [shape: f32[64,32], index: 1, kind: input, shape index: {}]
  %s2 = inlined_call_operand.vmem [shape: f32[64,1], index: 2, kind: input, shape index: {}]
  %s3 = inlined_call_operand.vmem [shape: f32[8,64], index: 3, kind: input, shape index: {}]
  %s4 = inlined_call_operand.vmem [shape: f32[8,1], index: 4, kind: input, shape index: {}]
  %s5 = inlined_call_operand.hbm [shape: f32[8,8], index: 5, kind: output, shape index: {}]
  %s6 = sld [smem:[#allocation0]]
  $region30: #{tpu_custom_call.1} parent=0
    _
  %s8 = ssub.s32 1, %s6
  %s9 = scalar_select 0, %s8, %s6
  $region1: #{tpu_custom_call.1} parent=0
    #allocation2 [shape = 'u8[4096]{0}', space=vmem, size = 0x1000, scoped, tag = 'output window, operand 0, single buffered']
    #allocation3 [shape = 's32[1]{0}', space=sflag, size = 0x4, scoped, tag = 'scoped memory for tpu_custom_call.1']
    %10 = vsyncpa [#allocation3], 0
    // Predicated region
    $region2: #{tpu_custom_call.1} parent=1 // pred_check
      _
    $region3: #{tpu_custom_call.1} parent=1 // pred_check_branch
      %12 = sbr.rel (0) target = $region5
    $region4: #{tpu_custom_call.1} parent=1 // pred_region
      _
    $region5: #{tpu_custom_call.1} parent=1 // pred_fallthru
      _
    // Predicated region
    $region6: #{tpu_custom_call.1} parent=1 // pred_check
      _
    $region7: #{tpu_custom_call.1} parent=1 // pred_check_branch
      %14 = sbr.rel (0) target = $region9
    $region8: #{tpu_custom_call.1} parent=1 // pred_region
      _
    $region9: #{tpu_custom_call.1} parent=1 // pred_fallthru
      _
    // Predicated region
    $region10: #{tpu_custom_call.1} parent=1 // pred_check
      _
    $region11: #{tpu_custom_call.1} parent=1 // pred_check_branch
      %16 = sbr.rel (0) target = $region13
    $region12: #{tpu_custom_call.1} parent=1 // pred_region
      _
    $region13: #{tpu_custom_call.1} parent=1 // pred_fallthru
      _
    // Predicated region
    $region14: #{tpu_custom_call.1} parent=1 // pred_check
      _
    $region15: #{tpu_custom_call.1} parent=1 // pred_check_branch
      %18 = sbr.rel (0) target = $region17
    $region16: #{tpu_custom_call.1} parent=1 // pred_region
      _
    $region17: #{tpu_custom_call.1} parent=1 // pred_fallthru
      _
    // Predicated region
    $region18: #{tpu_custom_call.1} parent=1 // pred_check
      _
    $region19: #{tpu_custom_call.1} parent=1 // pred_check_branch
      %20 = sbr.rel (0) target = $region21
    $region20: #{tpu_custom_call.1} parent=1 // pred_region
      _
    $region21: #{tpu_custom_call.1} parent=1 // pred_fallthru
      _
    %v21 = vld [vmem:[%s0] sm:$0xff]
    %v22 = vld [vmem:[%s1] sm:$0xff]
    %v23 = vld [vmem:[%s1 + $0x8] sm:$0xff]
    %v24 = vld [vmem:[%s1 + $0x10] sm:$0xff]
    %v25 = vld [vmem:[%s1 + $0x18] sm:$0xff]
    %v26 = vld [vmem:[%s1 + $0x20] sm:$0xff]
    %v27 = vld [vmem:[%s1 + $0x28] sm:$0xff]
    %v28 = vld [vmem:[%s1 + $0x30] sm:$0xff]
    %v29 = vld [vmem:[%s1 + $0x38] sm:$0xff]
    %v30 = vld [vmem:[%s2] sm:$0xff]
    %v31 = vld [vmem:[%s2 + $0x8] sm:$0xff]
    %v32 = vld [vmem:[%s2 + $0x10] sm:$0xff]
    %v33 = vld [vmem:[%s2 + $0x18] sm:$0xff]
    %v34 = vld [vmem:[%s2 + $0x20] sm:$0xff]
    %v35 = vld [vmem:[%s2 + $0x28] sm:$0xff]
    %v36 = vld [vmem:[%s2 + $0x30] sm:$0xff]
    %v37 = vld [vmem:[%s2 + $0x38] sm:$0xff]
    %39 = vset.pattern.permute.xlu0 0
    %40 = vperm.xlu0 %39, %v30
    %v41 = vpop.permute.xlu0 %40
    %44 = vset.pattern.permute.xlu0 0
    %45 = vperm.xlu0 %44, %v31
    %v46 = vpop.permute.xlu0 %45
    %49 = vset.pattern.permute.xlu0 0
    %50 = vperm.xlu0 %49, %v32
    %v51 = vpop.permute.xlu0 %50
    %54 = vset.pattern.permute.xlu0 0
    %55 = vperm.xlu0 %54, %v33
    %v56 = vpop.permute.xlu0 %55
    %59 = vset.pattern.permute.xlu0 0
    %60 = vperm.xlu0 %59, %v34
    %v61 = vpop.permute.xlu0 %60
    %64 = vset.pattern.permute.xlu0 0
    %65 = vperm.xlu0 %64, %v35
    %v66 = vpop.permute.xlu0 %65
    %69 = vset.pattern.permute.xlu0 0
    %70 = vperm.xlu0 %69, %v36
    %v71 = vpop.permute.xlu0 %70
    %74 = vset.pattern.permute.xlu0 0
    %75 = vperm.xlu0 %74, %v37
    %v76 = vpop.permute.xlu0 %75
    %vm78 = vcmask 261120
    %v80 = vsel %vm78, %v22, 0
    %v83 = vsel %vm78, %v23, 0
    %v86 = vsel %vm78, %v24, 0
    %v89 = vsel %vm78, %v25, 0
    %v92 = vsel %vm78, %v26, 0
    %v95 = vsel %vm78, %v27, 0
    %v98 = vsel %vm78, %v28, 0
    %v101 = vsel %vm78, %v29, 0
    %v104 = vsel %vm78, %v21, 0
    %106 = vmatpush.xpose.msra.mxu0 0.0
    %107 = vmatpush.xpose.msra.mxu0 0.0
    %108 = vmatpush.xpose.msra.mxu0 0.0
    %109 = vmatpush.xpose.msra.mxu0 0.0
    %110 = vmatpush.xpose.msra.mxu0 0.0
    %111 = vmatpush.xpose.msra.mxu0 0.0
    %112 = vmatpush.xpose.msra.mxu0 0.0
    %113 = vmatpush.xpose.msra.mxu0 0.0
    %114 = vmatpush.xpose.msra.mxu0 0.0
    %115 = vmatpush.xpose.msra.mxu0 0.0
    %116 = vmatpush.xpose.msra.mxu0 0.0
    %117 = vmatpush.xpose.msra.mxu0 0.0
    %118 = vmatpush.xpose.msra.mxu0 0.0
    %119 = vmatpush.xpose.msra.mxu0 0.0
    %120 = vmatpush.xpose.msra.mxu0 0.0
    %121 = vmatpush.xpose.msra.mxu0 %v104
    %122 = vmatmul.f32.gmra.mxu0 %v80
    %v123 = vpop.f32.mrf.mxu0
    %v124 = vadd.f32 %v41, %v123
    %125 = vmatmul.f32.gmra.mxu0 %v83
    %v126 = vpop.f32.mrf.mxu0
    %v127 = vadd.f32 %v46, %v126
    %128 = vmatmul.f32.gmra.mxu0 %v86
    %v129 = vpop.f32.mrf.mxu0
    %v130 = vadd.f32 %v51, %v129
    %131 = vmatmul.f32.gmra.mxu0 %v89
    %v132 = vpop.f32.mrf.mxu0
    %v133 = vadd.f32 %v56, %v132
    %134 = vmatmul.f32.gmra.mxu0 %v92
    %v135 = vpop.f32.mrf.mxu0
    %v136 = vadd.f32 %v61, %v135
    %137 = vmatmul.f32.gmra.mxu0 %v95
    %v138 = vpop.f32.mrf.mxu0
    %v139 = vadd.f32 %v66, %v138
    %140 = vmatmul.f32.gmra.mxu0 %v98
    %v141 = vpop.f32.mrf.mxu0
    %v142 = vadd.f32 %v71, %v141
    %143 = vmatmul.f32.gmra.mxu0 %v101
    %v144 = vpop.f32.mrf.mxu0
    %v145 = vadd.f32 %v76, %v144
    %146 = vdwg.mxu0
    %v147 = vmul.f32 %v124, 0.01
    %v148 = vmul.f32 %v127, 0.01
    %v149 = vmul.f32 %v130, 0.01
    %v150 = vmul.f32 %v133, 0.01
    %v151 = vmul.f32 %v136, 0.01
    %v152 = vmul.f32 %v139, 0.01
    %v153 = vmul.f32 %v142, 0.01
    %v154 = vmul.f32 %v145, 0.01
    %v155 = vmax.f32 %v124, %v147
    %v156 = vmax.f32 %v127, %v148
    %v157 = vmax.f32 %v130, %v149
    %v158 = vmax.f32 %v133, %v150
    %v159 = vmax.f32 %v136, %v151
    %v160 = vmax.f32 %v139, %v152
    %v161 = vmax.f32 %v142, %v153
    %v162 = vmax.f32 %v145, %v154
    %v163 = vld [vmem:[%s3] sm:$0xff]
    %v164 = vld [vmem:[%s4] sm:$0xff]
    %166 = vset.pattern.permute.xlu0 0
    %167 = vperm.xlu0 %166, %v164
    %v168 = vpop.permute.xlu0 %167
    %vm170 = vcmask 523264
    %v172 = vsel %vm170, %v163, 0
    %174 = vmatpush.msra.mxu0 0.0
    %175 = vmatpush.msra.mxu0 0.0
    %176 = vmatpush.msra.mxu0 0.0
    %177 = vmatpush.msra.mxu0 0.0
    %178 = vmatpush.msra.mxu0 0.0
    %179 = vmatpush.msra.mxu0 0.0
    %180 = vmatpush.msra.mxu0 0.0
    %181 = vmatpush.msra.mxu0 0.0
    %182 = vmatpush.msra.mxu0 %v162
    %183 = vmatpush.msra.mxu0 %v161
    %184 = vmatpush.msra.mxu0 %v160
    %185 = vmatpush.msra.mxu0 %v159
    %186 = vmatpush.msra.mxu0 %v158
    %187 = vmatpush.msra.mxu0 %v157
    %188 = vmatpush.msra.mxu0 %v156
    %189 = vmatpush.msra.mxu0 %v155
    %190 = vmatmul.f32.gmra.mxu0 %v172
    %v191 = vpop.f32.mrf.mxu0
    %v192 = vadd.f32 %v168, %v191
    %193 = vdwg.mxu0
    %vm194 = vcmask 64512
    %v195 = vsel %vm194, %v192, -inf
    %v196 = vrot.slane %v195, 4
    %v197 = vmax.f32 %v195, %v196
    %v198 = vrot.slane %v197, 2
    %v199 = vmax.f32 %v197, %v198
    %v200 = vrot.slane %v199, 1
    %v201 = vmax.f32 %v199, %v200
    %v202 = vsub.f32 %v192, %v201
    %v203 = vmul.f32 %v202, 1.442695
    %v204 = vpow.pop %v203
    %v205 = vsel %vm194, %v204, 0.0
    %v206 = vrot.slane %v205, 4
    %v207 = vadd.f32 %v205, %v206
    %v208 = vrot.slane %v207, 2
    %v209 = vadd.f32 %v207, %v208
    %v210 = vrot.slane %v209, 1
    %v211 = vadd.f32 %v209, %v210
    %v212 = vrcp.pop %v211
    %v213 = vmul.f32 %v211, %v212
    %v214 = vsub.f32 1.0, %v213
    %v215 = vmul.f32 %v212, %v214
    %v216 = vadd.f32 %v212, %v215
    %vm217 = vweird.f32 %v211
    %vm218 = vweird.f32 %v212
    %vm219 = vmor %vm217, %vm218
    %v220 = vsel %vm219, %v212, %v216
    %v221 = vand.u32 2147483647, %v211
    %vm222 = vcmp.eq.f32.partialorder %v221, 8.507059e+37
    %v223 = vand.u32 %v211, 2147483648
    %v224 = vor.u32 1.1754944e-38, %v223
    %v225 = vsel %vm222, %v224, %v220
    %v226 = vmul.f32 %v204, %v225
    %227 = vst.msk [vmem:[#allocation2] sm:$0xff] %vm194, %v226
    // Predicated region
    $region22: #{tpu_custom_call.1} parent=1 // pred_check
      _
    $region23: #{tpu_custom_call.1} parent=1 // pred_check_branch
      %229 = sbr.rel (0) target = $region25
    $region24: #{tpu_custom_call.1} parent=1 // pred_region
      %231 = vsyncadd [#allocation3], 0
      %s233 = sshll.u32 [#allocation2], 4
      %s234 = int_to_ptr.vmem [resolvable:$true] %s233
      %s235 = sshll.u32 %s5, 4
      %s236 = int_to_ptr.hbm [resolvable:$true] %s235
      %238 = dma.vmem_to_hbm [thread:$0]  %s234, 128, %s236, [#allocation3]
    $region25: #{tpu_custom_call.1} parent=1 // pred_fallthru
      _
    // Predicated region
    $region26: #{tpu_custom_call.1} parent=1 // pred_check
      _
    $region27: #{tpu_custom_call.1} parent=1 // pred_check_branch
      %240 = sbr.rel (0) target = $region29
    $region28: #{tpu_custom_call.1} parent=1 // pred_region
      %242 = dma.done [#allocation3], 128
    $region29: #{tpu_custom_call.1} parent=1 // pred_fallthru
      _
    %243 = vsyncpa [#allocation3], 1

</llo_original>
